<compile_context>
chip_gen: v6e
topology: v6e:2x2x1
jax: 0.10.0
libtpu: 0.0.40
codegen_flags: <defaults>
</compile_context>

<pallas_src>
import functools

import jax
import jax.numpy as jnp
import numpy as np
from jax import lax
from jax.experimental import pallas as pl
from jax.experimental.pallas import tpu as pltpu


# ----------------------------- Pallas kernels ------------------------------

def _proj_kernel(x_ref, w_ref, h_ref, sqn_ref, *, nheads, fdim):
    """HypLinear (Euclidean, no bias) for ALL heads at once, plus per-head ||h||^2.

    h = x @ [W0.T | W1.T | ...]  -> lane-dense (tile, nheads*F) output.
    sqn[:, hd] = ||h_hd||^2 is emitted here so the attention kernel never
    recomputes squared norms per (row-block, key-block) step.
    """
    h = jnp.dot(x_ref[...], w_ref[...], preferred_element_type=jnp.float32)
    h_ref[...] = h
    norms = [jnp.sum(h[:, hd * fdim:(hd + 1) * fdim] ** 2,
                     axis=-1, keepdims=True) for hd in range(nheads)]
    pad = sqn_ref.shape[1] - nheads            # head axis padded to 8 sublanes
    if pad:
        norms.append(jnp.zeros((h.shape[0], pad), jnp.float32))
    sqn_ref[...] = jnp.concatenate(norms, axis=1)


def _gat_kernel(hq_ref, hk_ref, sqq_ref, sqk_ref, adj_ref, out_ref,
                m_scr, l_scr, *, alpha, nheads, fdim, mxu_bf16):
    """Fused multi-head sparse-GAT aggregation with key-dimension tiling.

    grid = (query-row blocks ["parallel"], key blocks ["arbitrary"]).
    Flash-attention-style accumulation with a per-row running max subtraction,
    which cancels exactly in the h_prime / e_rowsum ratio but keeps exp finite.
    out_ref is resident across the key axis and used directly as accumulator.
    """
    k = pl.program_id(1)
    tm = out_ref.shape[0]

    @pl.when(k == 0)
    def _init():
        # every score is >= 0 (alpha * sqdist), so 0 is a valid initial max
        m_scr[...] = jnp.zeros_like(m_scr)
        l_scr[...] = jnp.zeros_like(l_scr)
        out_ref[...] = jnp.zeros_like(out_ref)

    mask = adj_ref[...] > 0                              # (tm, tk), int8 compare

    ph_parts = []
    scale_parts = []
    for hd in range(nheads):                             # static unroll
        sl = slice(hd * fdim, (hd + 1) * fdim)
        hq = hq_ref[:, sl]                               # (tm, F) query rows
        hk = hk_ref[:, sl]                               # (tk, F) key chunk

        # Euclidean sqdist via the MXU: ||a-b||^2 = |a|^2 + |b|^2 - 2 a.b
        # (norms precomputed once by the projection kernel). Gram kept in f32:
        # bf16 here suffers catastrophic cancellation for near-identical rows.
        sq_i = sqq_ref[:, hd:hd + 1]                     # (tm, 1)
        sq_j = sqk_ref[hd:hd + 1, :]                     # (1, tk)
        gram = lax.dot_general(hq, hk, (((1,), (1,)), ((), ())),
                               preferred_element_type=jnp.float32)  # hq @ hk.T
        sqd = jnp.maximum(sq_i + sq_j - 2.0 * gram, 0.0)

        # exponent of edge_e = exp(-leakyrelu(-sqdist)) = exp(alpha*sqdist).
        # Non-edges filled with 0 (a lower bound of every real score) so the
        # running max stays finite and >= every edge score.
        s = jnp.where(mask, alpha * sqd, 0.0)            # (tm, tk)

        m_prev = m_scr[hd]                               # (tm, 1)
        m_new = jnp.maximum(m_prev, jnp.max(s, axis=-1, keepdims=True))
        scale = jnp.exp(m_prev - m_new)                  # <= 1, rescales acc
        p = jnp.where(mask, jnp.exp(s - m_new), 0.0)     # (tm, tk) weights

        if mxu_bf16:
            # bf16 operands only for the MXU aggregation matmul; keep the
            # denominator consistent with the (rounded) numerator weights.
            p_mm = p.astype(jnp.bfloat16)
            hk_mm = hk.astype(jnp.bfloat16)
            psum = jnp.sum(p_mm.astype(jnp.float32), axis=-1, keepdims=True)
        else:
            p_mm, hk_mm = p, hk
            psum = jnp.sum(p, axis=-1, keepdims=True)

        l_scr[hd] = scale * l_scr[hd] + psum
        m_scr[hd] = m_new

        ph_parts.append(jnp.dot(p_mm, hk_mm,
                                preferred_element_type=jnp.float32))  # (tm, F)
        scale_parts.append(jnp.broadcast_to(scale, (tm, fdim)))

    # ONE unmasked 128-lane-wide accumulator update per step (no per-head
    # 32-lane sliced read-modify-writes).
    ph_all = jnp.concatenate(ph_parts, axis=1)           # (tm, H*F)
    scale_all = jnp.concatenate(scale_parts, axis=1)     # (tm, H*F)
    out_ref[...] = scale_all * out_ref[...] + ph_all

    @pl.when(k == pl.num_programs(1) - 1)
    def _finalize():
        # exact reciprocal (the 8-bit approx reciprocal caused ~4e-3 errors);
        # this runs once per row block so it is essentially free.
        inv_parts = [jnp.broadcast_to(1.0 / l_scr[hd], (tm, fdim))
                     for hd in range(nheads)]
        inv_all = jnp.concatenate(inv_parts, axis=1)     # (tm, H*F)
        # single lane-dense store of all heads concatenated, ReLU applied
        out_ref[...] = jnp.maximum(out_ref[...] * inv_all, 0.0)


# ------------------------------ wrapper --------------------------------------

def _largest_tile(n, cap):
    """Largest multiple of 128 that divides `n` (a multiple of 128), <= cap."""
    t = min(cap, n)
    while n % t:
        t -= 128
    return t


def graph_attention_layer(x, adj, head_weights, *, alpha, mxu_bf16=False,
                          tile_m_cap=256, tile_k_cap=1024, tile_p_cap=512):
    """GraphAttentionLayer.forward((x, adj)) — Euclidean concat path, eval mode.

    Precondition (same as the PyTorch original): every real node has at least
    one edge (e.g. self-loops), otherwise h_prime divides by zero.
    """
    N, D = x.shape
    H = len(head_weights)
    F = head_weights[0].shape[0]
    HF = H * F
    Hp = 8 * pl.cdiv(H, 8)                       # head axis padded to 8 sublanes

    # Stack all heads' HypLinear weights -> one matmul, lane-dense h.
    w_all = jnp.concatenate([w.T for w in head_weights], axis=1)   # (D, H*F)

    # Pad the node count to a multiple of 128 so row/key tiles divide exactly.
    Np = 128 * pl.cdiv(N, 128)
    if Np != N:
        x_p = jnp.pad(x, ((0, Np - N), (0, 0)))
        adj_p = jnp.pad(adj, ((0, Np - N), (0, Np - N)))
        pad_idx = jnp.arange(N, Np)
        adj_p = adj_p.at[pad_idx, pad_idx].set(1.0)  # self-loop pad rows: no 0/0
    else:
        x_p, adj_p = x, adj
    adj_i8 = (adj_p > 0).astype(jnp.int8)        # 4x less streamed HBM traffic

    # Asymmetric adaptive tiles; at small N the grids collapse to a single step.
    tile_m = _largest_tile(Np, tile_m_cap)       # row tile (parallel / 2-TC shard)
    tile_k = _largest_tile(Np, tile_k_cap)       # key tile (deep p@hk contraction)
    tile_p = _largest_tile(Np, tile_p_cap)       # projection row tile

    # ---- kernel 1: fused multi-head projection  h = x @ W_all  (+ norms) ----
    h, sqn = pl.pallas_call(
        functools.partial(_proj_kernel, nheads=H, fdim=F),
        out_shape=(jax.ShapeDtypeStruct((Np, HF), jnp.float32),
                   jax.ShapeDtypeStruct((Np, Hp), jnp.float32)),
        grid_spec=pltpu.PrefetchScalarGridSpec(
            num_scalar_prefetch=0,
            grid=(Np // tile_p,),
            in_specs=[pl.BlockSpec((tile_p, D), lambda i: (i, 0)),
                      pl.BlockSpec((D, HF), lambda i: (0, 0))],
            out_specs=[pl.BlockSpec((tile_p, HF), lambda i: (i, 0)),
                       pl.BlockSpec((tile_p, Hp), lambda i: (i, 0))]),
        compiler_params=pltpu.CompilerParams(
            dimension_semantics=("parallel",)),
    )(x_p, w_all)

    # key-side norms in transposed (lane-major over nodes) layout: tiny array
    sqn_t = sqn.T                                # (Hp, Np)

    # ---- kernel 2: fused multi-head attention / aggregation ----
    kernel = functools.partial(_gat_kernel, alpha=alpha, nheads=H, fdim=F,
                               mxu_bf16=mxu_bf16)
    out = pl.pallas_call(
        kernel,
        out_shape=jax.ShapeDtypeStruct((Np, HF), jnp.float32),
        grid_spec=pltpu.PrefetchScalarGridSpec(
            num_scalar_prefetch=0,
            grid=(Np // tile_m, Np // tile_k),   # (row blocks, key blocks)
            in_specs=[
                pl.BlockSpec((tile_m, HF), lambda i, k: (i, 0)),     # query rows (resident over k)
                pl.BlockSpec((tile_k, HF), lambda i, k: (k, 0)),     # key chunk (streamed)
                pl.BlockSpec((tile_m, Hp), lambda i, k: (i, 0)),     # query-side ||h||^2 (resident)
                pl.BlockSpec((Hp, tile_k), lambda i, k: (0, k)),     # key-side ||h||^2 (streamed)
                pl.BlockSpec((tile_m, tile_k), lambda i, k: (i, k)), # int8 adj tile
            ],
            out_specs=pl.BlockSpec((tile_m, HF), lambda i, k: (i, 0)),
            scratch_shapes=[
                pltpu.VMEM((H, tile_m, 1), jnp.float32),   # per-head running max
                pltpu.VMEM((H, tile_m, 1), jnp.float32),   # per-head e_rowsum
            ]),
        compiler_params=pltpu.CompilerParams(
            dimension_semantics=("parallel", "arbitrary")),
    )(h, h, sqn, sqn_t, adj_i8)

    # F.dropout(...) -> identity at inference; strip padded rows.
    return out[:N], adj


# ------------------------------ reference -----------------------------------

def reference(x, adj, head_weights, alpha):
    outs = []
    for w in head_weights:
        h = x @ w.T
        diff = h[:, None, :] - h[None, :, :]
        sqd = jnp.sum(diff * diff, axis=-1)
        edge_h = -sqd
        lr = jnp.where(edge_h > 0, edge_h, alpha * edge_h)
        e = jnp.exp(-lr) * adj
        rowsum = e.sum(-1, keepdims=True)
        hp = (e @ h) / rowsum
        outs.append(jnp.maximum(hp, 0.0))
    return jnp.concatenate(outs, axis=1)


# --------------------------------- main --------------------------------------

if __name__ == "__main__":
    # nheads*out_dim = 128 -> lane-dense concatenated output
    N, IN_DIM, OUT_DIM, NHEADS = 256, 64, 32, 4
    ALPHA = 0.2          # LeakyReLU negative slope
    # dropout=0.5, curvature=1.0, use_bias=False: inert in this (eval, Euclidean) path

    key = jax.random.PRNGKey(0)
    kx, kadj, *kw = jax.random.split(key, 2 + NHEADS)

    # moderate feature scale keeps exp(alpha*sqdist) finite in the f32 reference
    x = 0.5 * jax.random.normal(kx, (N, IN_DIM), dtype=jnp.float32)

    # dense 0/1 adjacency with self-loops (stands in for the sparse COO adj)
    adj = (jax.random.uniform(kadj, (N, N)) < 0.25).astype(jnp.float32)
    adj = jnp.maximum(adj, jnp.eye(N, dtype=jnp.float32))

    # HypLinear weights: xavier_uniform_(gain=sqrt(2)), shape (out, in), no bias
    limit = float(np.sqrt(2.0) * np.sqrt(6.0 / (IN_DIM + OUT_DIM)))
    head_weights = [
        jax.random.uniform(k, (OUT_DIM, IN_DIM), dtype=jnp.float32,
                           minval=-limit, maxval=limit)
        for k in kw
    ]

    h_ref = reference(x, adj, head_weights, ALPHA)

    # --- full-precision path (tight tolerance) ---
    h_out, adj_out = graph_attention_layer(x, adj, head_weights,
                                           alpha=ALPHA, mxu_bf16=False)
    h_out = jax.block_until_ready(h_out)
    np.testing.assert_allclose(np.asarray(h_out), np.asarray(h_ref),
                               rtol=2e-3, atol=2e-3)
    assert h_out.shape == (N, NHEADS * OUT_DIM)

    # --- bf16-operand aggregation matmul (perf path, looser tolerance since
    #     the operands are deliberately rounded to bf16) ---
    h_bf16, _ = graph_attention_layer(x, adj, head_weights,
                                      alpha=ALPHA, mxu_bf16=True)
    h_bf16 = jax.block_until_ready(h_bf16)
    np.testing.assert_allclose(np.asarray(h_bf16), np.asarray(h_ref),
                               rtol=3e-2, atol=3e-2)

    print("KERNEL_OK")
</pallas_src>

<mosaic_0001>
module attributes {stable_mosaic.version = 11 : i64} {
  func.func @_proj_kernel(%arg0: i32, %arg1: memref<256x64xf32, #tpu.memory_space<vmem>>, %arg2: memref<64x128xf32, #tpu.memory_space<vmem>>, %arg3: memref<256x128xf32, #tpu.memory_space<vmem>>, %arg4: memref<256x8xf32, #tpu.memory_space<vmem>>) attributes {dimension_semantics = [#tpu.dimension_semantics<parallel>], iteration_bounds = array<i64: 1>, scalar_prefetch = 0 : i64, scratch_operands = 0 : i64, tpu.core_type = #tpu.core_type<tc>, window_params = [{transform_indices = @transform_0, window_bounds = array<i64: 256, 64>}, {pipeline_mode = #tpu.pipeline_mode<synchronous>, transform_indices = @transform_1, window_bounds = array<i64: 64, 128>}, {transform_indices = @transform_2, window_bounds = array<i64: 256, 128>}, {transform_indices = @transform_3, window_bounds = array<i64: 256, 8>}]} {
    %c0 = arith.constant 0 : index
    %c0_0 = arith.constant 0 : index
    %0 = vector.load %arg1[%c0, %c0_0] : memref<256x64xf32, #tpu.memory_space<vmem>>, vector<256x64xf32>
    %c0_1 = arith.constant 0 : index
    %c0_2 = arith.constant 0 : index
    %1 = vector.load %arg2[%c0_1, %c0_2] : memref<64x128xf32, #tpu.memory_space<vmem>>, vector<64x128xf32>
    %cst = arith.constant dense<0.000000e+00> : vector<256x128xf32>
    %2 = tpu.matmul %0, %1, %cst {dimension_numbers = #tpu.dot_dimension_numbers<[1], [0], [0], [1], [0, 0, 1, 1], [], []>} : vector<256x64xf32>, vector<64x128xf32>, vector<256x128xf32> -> vector<256x128xf32>
    %c0_3 = arith.constant 0 : index
    %c0_4 = arith.constant 0 : index
    %3 = vector.load %arg3[%c0_3, %c0_4] : memref<256x128xf32, #tpu.memory_space<vmem>>, vector<256x128xf32>
    tpu.vector_store %arg3[%c0_3, %c0_4], %2 {strides = array<i32>} : memref<256x128xf32, #tpu.memory_space<vmem>>, vector<256x128xf32>,
    %4 = vector.extract_strided_slice %2 {offsets = [0, 0], sizes = [256, 32], strides = [1, 1]} : vector<256x128xf32> to vector<256x32xf32>
    %5 = arith.mulf %4, %4 : vector<256x32xf32>
    %cst_5 = arith.constant dense<0.000000e+00> : vector<256xf32>
    %6 = vector.multi_reduction <add>, %5, %cst_5 [1] : vector<256x32xf32> to vector<256xf32>
    %7 = vector.shape_cast %6 : vector<256xf32> to vector<256x1xf32>
    %8 = vector.extract_strided_slice %2 {offsets = [0, 32], sizes = [256, 32], strides = [1, 1]} : vector<256x128xf32> to vector<256x32xf32>
    %9 = arith.mulf %8, %8 : vector<256x32xf32>
    %cst_6 = arith.constant dense<0.000000e+00> : vector<256xf32>
    %10 = vector.multi_reduction <add>, %9, %cst_6 [1] : vector<256x32xf32> to vector<256xf32>
    %11 = vector.shape_cast %10 : vector<256xf32> to vector<256x1xf32>
    %12 = vector.extract_strided_slice %2 {offsets = [0, 64], sizes = [256, 32], strides = [1, 1]} : vector<256x128xf32> to vector<256x32xf32>
    %13 = arith.mulf %12, %12 : vector<256x32xf32>
    %cst_7 = arith.constant dense<0.000000e+00> : vector<256xf32>
    %14 = vector.multi_reduction <add>, %13, %cst_7 [1] : vector<256x32xf32> to vector<256xf32>
    %15 = vector.shape_cast %14 : vector<256xf32> to vector<256x1xf32>
    %16 = vector.extract_strided_slice %2 {offsets = [0, 96], sizes = [256, 32], strides = [1, 1]} : vector<256x128xf32> to vector<256x32xf32>
    %17 = arith.mulf %16, %16 : vector<256x32xf32>
    %cst_8 = arith.constant dense<0.000000e+00> : vector<256xf32>
    %18 = vector.multi_reduction <add>, %17, %cst_8 [1] : vector<256x32xf32> to vector<256xf32>
    %19 = vector.shape_cast %18 : vector<256xf32> to vector<256x1xf32>
    %cst_9 = arith.constant 0.000000e+00 : f32
    %20 = vector.broadcast %cst_9 : f32 to vector<256x4xf32>
    %21 = tpu.concatenate %7, %11, %15, %19, %20 in 1 : vector<256x1xf32>, vector<256x1xf32>, vector<256x1xf32>, vector<256x1xf32>, vector<256x4xf32> -> vector<256x8xf32>
    %c0_10 = arith.constant 0 : index
    %c0_11 = arith.constant 0 : index
    %22 = vector.load %arg4[%c0_10, %c0_11] : memref<256x8xf32, #tpu.memory_space<vmem>>, vector<256x8xf32>
    tpu.vector_store %arg4[%c0_10, %c0_11], %21 {strides = array<i32>} : memref<256x8xf32, #tpu.memory_space<vmem>>, vector<256x8xf32>,
    return
  }
  func.func @transform_0(%arg0: i32) -> (i32, i32) {
    %c0_i32 = arith.constant 0 : i32
    %c0_i32_0 = arith.constant 0 : i32
    return %arg0, %c0_i32 : i32, i32
  }
  func.func @transform_1(%arg0: i32) -> (i32, i32) {
    %c0_i32 = arith.constant 0 : i32
    %c0_i32_0 = arith.constant 0 : i32
    %c0_i32_1 = arith.constant 0 : i32
    return %c0_i32, %c0_i32_0 : i32, i32
  }
  func.func @transform_2(%arg0: i32) -> (i32, i32) {
    %c0_i32 = arith.constant 0 : i32
    %c0_i32_0 = arith.constant 0 : i32
    return %arg0, %c0_i32 : i32, i32
  }
  func.func @transform_3(%arg0: i32) -> (i32, i32) {
    %c0_i32 = arith.constant 0 : i32
    %c0_i32_0 = arith.constant 0 : i32
    return %arg0, %c0_i32 : i32, i32
  }
}

</mosaic_0001>

<llo_original>
// kernel: tpu_custom_call.1
$region0: #{tpu_custom_call.1}
  #allocation0 [shape = 'u32[]', space=smem, size = 0x4, offset = 0x4, fixed_abs, tag = 'smem constant byte address 0x4 - core index']
  #allocation1 [shape = 'u32[144,128]{1,0:T(1,128)}', space=vmem, size = 0x12000, scoped, tag = 'internal scratch']
  %s0 = inlined_call_operand.vmem [shape: f32[256,64], index: 0, kind: input, shape index: {}]
  %s1 = inlined_call_operand.vmem [shape: f32[64,128], index: 1, kind: input, shape index: {}]
  %s2 = inlined_call_operand.hbm [shape: f32[256,128], index: 2, kind: output, shape index: {0}]
  %s3 = inlined_call_operand.vmem [shape: f32[256,8], index: 3, kind: output, shape index: {1}]
  %4 = xla_tuple %s2, %s3
  %s5 = sld [smem:[#allocation0]]
  $region26: #{tpu_custom_call.1} parent=0
    _
  %s7 = ssub.s32 1, %s5
  %s8 = scalar_select 0, %s7, %s5
  $region1: #{tpu_custom_call.1} parent=0
    #allocation2 [shape = 'u8[131072]{0}', space=vmem, size = 0x20000, scoped, tag = 'output window, operand 0, single buffered']
    #allocation3 [shape = 's32[1]{0}', space=sflag, size = 0x4, scoped, tag = 'scoped memory for tpu_custom_call.1']
    %9 = vsyncpa [#allocation3], 0
    // Predicated region
    $region2: #{tpu_custom_call.1} parent=1 // pred_check
      _
    $region3: #{tpu_custom_call.1} parent=1 // pred_check_branch
      %11 = sbr.rel (0) target = $region5
    $region4: #{tpu_custom_call.1} parent=1 // pred_region
      _
    $region5: #{tpu_custom_call.1} parent=1 // pred_fallthru
      _
    // Predicated region
    $region6: #{tpu_custom_call.1} parent=1 // pred_check
      _
    $region7: #{tpu_custom_call.1} parent=1 // pred_check_branch
      %13 = sbr.rel (0) target = $region9
    $region8: #{tpu_custom_call.1} parent=1 // pred_region
      _
    $region9: #{tpu_custom_call.1} parent=1 // pred_fallthru
      _
    %v14 = vld [vmem:[%s0] sm:$0xff]
    %v15 = vld [vmem:[%s0 + $0x8] sm:$0xff]
    %v16 = vld [vmem:[%s0 + $0x10] sm:$0xff]
    %v17 = vld [vmem:[%s0 + $0x18] sm:$0xff]
    %v18 = vld [vmem:[%s0 + $0x20] sm:$0xff]
    %v19 = vld [vmem:[%s0 + $0x28] sm:$0xff]
    %v20 = vld [vmem:[%s0 + $0x30] sm:$0xff]
    %v21 = vld [vmem:[%s0 + $0x38] sm:$0xff]
    %v22 = vld [vmem:[%s0 + $0x40] sm:$0xff]
    %v23 = vld [vmem:[%s0 + $0x48] sm:$0xff]
    %v24 = vld [vmem:[%s0 + $0x50] sm:$0xff]
    %v25 = vld [vmem:[%s0 + $0x58] sm:$0xff]
    %v26 = vld [vmem:[%s0 + $0x60] sm:$0xff]
    %v27 = vld [vmem:[%s0 + $0x68] sm:$0xff]
    %v28 = vld [vmem:[%s0 + $0x70] sm:$0xff]
    %v29 = vld [vmem:[%s0 + $0x78] sm:$0xff]
    %v30 = vld [vmem:[%s0 + $0x80] sm:$0xff]
    %v31 = vld [vmem:[%s0 + $0x88] sm:$0xff]
    %v32 = vld [vmem:[%s0 + $0x90] sm:$0xff]
    %v33 = vld [vmem:[%s0 + $0x98] sm:$0xff]
    %v34 = vld [vmem:[%s0 + $0xa0] sm:$0xff]
    %v35 = vld [vmem:[%s0 + $0xa8] sm:$0xff]
    %v36 = vld [vmem:[%s0 + $0xb0] sm:$0xff]
    %v37 = vld [vmem:[%s0 + $0xb8] sm:$0xff]
    %v38 = vld [vmem:[%s0 + $0xc0] sm:$0xff]
    %v39 = vld [vmem:[%s0 + $0xc8] sm:$0xff]
    %v40 = vld [vmem:[%s0 + $0xd0] sm:$0xff]
    %v41 = vld [vmem:[%s0 + $0xd8] sm:$0xff]
    %v42 = vld [vmem:[%s0 + $0xe0] sm:$0xff]
    %v43 = vld [vmem:[%s0 + $0xe8] sm:$0xff]
    %v44 = vld [vmem:[%s0 + $0xf0] sm:$0xff]
    %v45 = vld [vmem:[%s0 + $0xf8] sm:$0xff]
    %v46 = vld [vmem:[%s1] sm:$0xff]
    %v47 = vld [vmem:[%s1 + $0x8] sm:$0xff]
    %v48 = vld [vmem:[%s1 + $0x10] sm:$0xff]
    %v49 = vld [vmem:[%s1 + $0x18] sm:$0xff]
    %v50 = vld [vmem:[%s1 + $0x20] sm:$0xff]
    %v51 = vld [vmem:[%s1 + $0x28] sm:$0xff]
    %v52 = vld [vmem:[%s1 + $0x30] sm:$0xff]
    %v53 = vld [vmem:[%s1 + $0x38] sm:$0xff]
    %vm54 = vcmask 523264
    %v56 = vsel %vm54, %v14, 0
    %v59 = vsel %vm54, %v15, 0
    %v62 = vsel %vm54, %v16, 0
    %v65 = vsel %vm54, %v17, 0
    %v68 = vsel %vm54, %v18, 0
    %v71 = vsel %vm54, %v19, 0
    %v74 = vsel %vm54, %v20, 0
    %v77 = vsel %vm54, %v21, 0
    %v80 = vsel %vm54, %v22, 0
    %v83 = vsel %vm54, %v23, 0
    %v86 = vsel %vm54, %v24, 0
    %v89 = vsel %vm54, %v25, 0
    %v92 = vsel %vm54, %v26, 0
    %v95 = vsel %vm54, %v27, 0
    %v98 = vsel %vm54, %v28, 0
    %v101 = vsel %vm54, %v29, 0
    %v104 = vsel %vm54, %v30, 0
    %v107 = vsel %vm54, %v31, 0
    %v110 = vsel %vm54, %v32, 0
    %v113 = vsel %vm54, %v33, 0
    %v116 = vsel %vm54, %v34, 0
    %v119 = vsel %vm54, %v35, 0
    %v122 = vsel %vm54, %v36, 0
    %v125 = vsel %vm54, %v37, 0
    %v128 = vsel %vm54, %v38, 0
    %v131 = vsel %vm54, %v39, 0
    %v134 = vsel %vm54, %v40, 0
    %v137 = vsel %vm54, %v41, 0
    %v140 = vsel %vm54, %v42, 0
    %v143 = vsel %vm54, %v43, 0
    %v146 = vsel %vm54, %v44, 0
    %v149 = vsel %vm54, %v45, 0
    %151 = vmatprep.subr.mxu0 0.0
    %152 = vmatpush1.msra.mxu0 0.0
    %153 = vmatprep.subr.mxu0 0.0
    %154 = vmatpush1.msra.mxu0 0.0
    %155 = vmatprep.subr.mxu0 0.0
    %156 = vmatpush1.msra.mxu0 0.0
    %157 = vmatprep.subr.mxu0 0.0
    %158 = vmatpush1.msra.mxu0 0.0
    %159 = vmatprep.subr.mxu0 0.0
    %160 = vmatpush1.msra.mxu0 0.0
    %161 = vmatprep.subr.mxu0 0.0
    %162 = vmatpush1.msra.mxu0 0.0
    %163 = vmatprep.subr.mxu0 0.0
    %164 = vmatpush1.msra.mxu0 0.0
    %165 = vmatprep.subr.mxu0 0.0
    %166 = vmatpush1.msra.mxu0 0.0
    %167 = vmatprep.subr.mxu0 0.0
    %168 = vmatpush1.msra.mxu0 %v53
    %169 = vmatprep.subr.mxu0 0.0
    %170 = vmatpush1.msra.mxu0 %v52
    %171 = vmatprep.subr.mxu0 0.0
    %172 = vmatpush1.msra.mxu0 %v51
    %173 = vmatprep.subr.mxu0 0.0
    %174 = vmatpush1.msra.mxu0 %v50
    %175 = vmatprep.subr.mxu0 0.0
    %176 = vmatpush1.msra.mxu0 %v49
    %177 = vmatprep.subr.mxu0 0.0
    %178 = vmatpush1.msra.mxu0 %v48
    %179 = vmatprep.subr.mxu0 0.0
    %180 = vmatpush1.msra.mxu0 %v47
    %181 = vmatprep.subr.mxu0 0.0
    %182 = vmatpush1.msra.mxu0 %v46
    %183 = vmatprep.subr.mxu0 0.0
    %184 = vmatpush2.msra.mxu0 0.0
    %185 = vmatprep.subr.mxu0 0.0
    %186 = vmatpush2.msra.mxu0 0.0
    %187 = vmatprep.subr.mxu0 0.0
    %188 = vmatpush2.msra.mxu0 0.0
    %189 = vmatprep.subr.mxu0 0.0
    %190 = vmatpush2.msra.mxu0 0.0
    %191 = vmatprep.subr.mxu0 0.0
    %192 = vmatpush2.msra.mxu0 0.0
    %193 = vmatprep.subr.mxu0 0.0
    %194 = vmatpush2.msra.mxu0 0.0
    %195 = vmatprep.subr.mxu0 0.0
    %196 = vmatpush2.msra.mxu0 0.0
    %197 = vmatprep.subr.mxu0 0.0
    %198 = vmatpush2.msra.mxu0 0.0
    %199 = vmatprep.subr.mxu0 0.0
    %200 = vmatpush2.msra.mxu0 0.0
    %201 = vmatprep.subr.mxu0 0.0
    %202 = vmatpush2.msra.mxu0 0.0
    %203 = vmatprep.subr.mxu0 0.0
    %204 = vmatpush2.msra.mxu0 0.0
    %205 = vmatprep.subr.mxu0 0.0
    %206 = vmatpush2.msra.mxu0 0.0
    %207 = vmatprep.subr.mxu0 0.0
    %208 = vmatpush2.msra.mxu0 0.0
    %209 = vmatprep.subr.mxu0 0.0
    %210 = vmatpush2.msra.mxu0 0.0
    %211 = vmatprep.subr.mxu0 0.0
    %212 = vmatpush2.msra.mxu0 0.0
    %213 = vmatprep.subr.mxu0 0.0
    %214 = vmatpush2.msra.mxu0 0.0
    %215 = vmatprep.mubr.f32.mxu0 0.0
    %216 = vmatmul.mubr.f32.gmra.mxu0 %v56
    %v217 = vpop.f32.mrf.mxu0
    %v218 = vadd.f32 0.0, %v217
    %v219 = vpop.f32.mrf.mxu0
    %220 = vmatprep.mubr.f32.mxu0 0.0
    %221 = vmatmul.mubr.f32.gmra.mxu0 %v59
    %v222 = vpop.f32.mrf.mxu0
    %v223 = vadd.f32 0.0, %v222
    %v224 = vpop.f32.mrf.mxu0
    %225 = vmatprep.mubr.f32.mxu0 0.0
    %226 = vmatmul.mubr.f32.gmra.mxu0 %v62
    %v227 = vpop.f32.mrf.mxu0
    %v228 = vadd.f32 0.0, %v227
    %v229 = vpop.f32.mrf.mxu0
    %230 = vmatprep.mubr.f32.mxu0 0.0
    %231 = vmatmul.mubr.f32.gmra.mxu0 %v65
    %v232 = vpop.f32.mrf.mxu0
    %v233 = vadd.f32 0.0, %v232
    %v234 = vpop.f32.mrf.mxu0
    %235 = vmatprep.mubr.f32.mxu0 0.0
    %236 = vmatmul.mubr.f32.gmra.mxu0 %v68
    %v237 = vpop.f32.mrf.mxu0
    %v238 = vadd.f32 0.0, %v237
    %v239 = vpop.f32.mrf.mxu0
    %240 = vmatprep.mubr.f32.mxu0 0.0
    %241 = vmatmul.mubr.f32.gmra.mxu0 %v71
    %v242 = vpop.f32.mrf.mxu0
    %v243 = vadd.f32 0.0, %v242
    %v244 = vpop.f32.mrf.mxu0
    %245 = vmatprep.mubr.f32.mxu0 0.0
    %246 = vmatmul.mubr.f32.gmra.mxu0 %v74
    %v247 = vpop.f32.mrf.mxu0
    %v248 = vadd.f32 0.0, %v247
    %v249 = vpop.f32.mrf.mxu0
    %250 = vmatprep.mubr.f32.mxu0 0.0
    %251 = vmatmul.mubr.f32.gmra.mxu0 %v77
    %v252 = vpop.f32.mrf.mxu0
    %v253 = vadd.f32 0.0, %v252
    %v254 = vpop.f32.mrf.mxu0
    %255 = vmatprep.mubr.f32.mxu0 0.0
    %256 = vmatmul.mubr.f32.gmra.mxu0 %v80
    %v257 = vpop.f32.mrf.mxu0
    %v258 = vadd.f32 0.0, %v257
    %v259 = vpop.f32.mrf.mxu0
    %260 = vmatprep.mubr.f32.mxu0 0.0
    %261 = vmatmul.mubr.f32.gmra.mxu0 %v83
    %v262 = vpop.f32.mrf.mxu0
    %v263 = vadd.f32 0.0, %v262
    %v264 = vpop.f32.mrf.mxu0
    %265 = vmatprep.mubr.f32.mxu0 0.0
    %266 = vmatmul.mubr.f32.gmra.mxu0 %v86
    %v267 = vpop.f32.mrf.mxu0
    %v268 = vadd.f32 0.0, %v267
    %v269 = vpop.f32.mrf.mxu0
    %270 = vmatprep.mubr.f32.mxu0 0.0
    %271 = vmatmul.mubr.f32.gmra.mxu0 %v89
    %v272 = vpop.f32.mrf.mxu0
    %v273 = vadd.f32 0.0, %v272
    %v274 = vpop.f32.mrf.mxu0
    %275 = vmatprep.mubr.f32.mxu0 0.0
    %276 = vmatmul.mubr.f32.gmra.mxu0 %v92
    %v277 = vpop.f32.mrf.mxu0
    %v278 = vadd.f32 0.0, %v277
    %v279 = vpop.f32.mrf.mxu0
    %280 = vmatprep.mubr.f32.mxu0 0.0
    %281 = vmatmul.mubr.f32.gmra.mxu0 %v95
    %v282 = vpop.f32.mrf.mxu0
    %v283 = vadd.f32 0.0, %v282
    %v284 = vpop.f32.mrf.mxu0
    %285 = vmatprep.mubr.f32.mxu0 0.0
    %286 = vmatmul.mubr.f32.gmra.mxu0 %v98
    %v287 = vpop.f32.mrf.mxu0
    %v288 = vadd.f32 0.0, %v287
    %v289 = vpop.f32.mrf.mxu0
    %290 = vmatprep.mubr.f32.mxu0 0.0
    %291 = vmatmul.mubr.f32.gmra.mxu0 %v101
    %v292 = vpop.f32.mrf.mxu0
    %v293 = vadd.f32 0.0, %v292
    %v294 = vpop.f32.mrf.mxu0
    %295 = vmatprep.mubr.f32.mxu0 0.0
    %296 = vmatmul.mubr.f32.gmra.mxu0 %v104
    %v297 = vpop.f32.mrf.mxu0
    %v298 = vadd.f32 0.0, %v297
    %v299 = vpop.f32.mrf.mxu0
    %300 = vmatprep.mubr.f32.mxu0 0.0
    %301 = vmatmul.mubr.f32.gmra.mxu0 %v107
    %v302 = vpop.f32.mrf.mxu0
    %v303 = vadd.f32 0.0, %v302
    %v304 = vpop.f32.mrf.mxu0
    %305 = vmatprep.mubr.f32.mxu0 0.0
    %306 = vmatmul.mubr.f32.gmra.mxu0 %v110
    %v307 = vpop.f32.mrf.mxu0
    %v308 = vadd.f32 0.0, %v307
    %v309 = vpop.f32.mrf.mxu0
    %310 = vmatprep.mubr.f32.mxu0 0.0
    %311 = vmatmul.mubr.f32.gmra.mxu0 %v113
    %v312 = vpop.f32.mrf.mxu0
    %v313 = vadd.f32 0.0, %v312
    %v314 = vpop.f32.mrf.mxu0
    %315 = vmatprep.mubr.f32.mxu0 0.0
    %316 = vmatmul.mubr.f32.gmra.mxu0 %v116
    %v317 = vpop.f32.mrf.mxu0
    %v318 = vadd.f32 0.0, %v317
    %v319 = vpop.f32.mrf.mxu0
    %320 = vmatprep.mubr.f32.mxu0 0.0
    %321 = vmatmul.mubr.f32.gmra.mxu0 %v119
    %v322 = vpop.f32.mrf.mxu0
    %v323 = vadd.f32 0.0, %v322
    %v324 = vpop.f32.mrf.mxu0
    %325 = vmatprep.mubr.f32.mxu0 0.0
    %326 = vmatmul.mubr.f32.gmra.mxu0 %v122
    %v327 = vpop.f32.mrf.mxu0
    %v328 = vadd.f32 0.0, %v327
    %v329 = vpop.f32.mrf.mxu0
    %330 = vmatprep.mubr.f32.mxu0 0.0
    %331 = vmatmul.mubr.f32.gmra.mxu0 %v125
    %v332 = vpop.f32.mrf.mxu0
    %v333 = vadd.f32 0.0, %v332
    %v334 = vpop.f32.mrf.mxu0
    %335 = vmatprep.mubr.f32.mxu0 0.0
    %336 = vmatmul.mubr.f32.gmra.mxu0 %v128
    %v337 = vpop.f32.mrf.mxu0
    %v338 = vadd.f32 0.0, %v337
    %v339 = vpop.f32.mrf.mxu0
    %340 = vmatprep.mubr.f32.mxu0 0.0
    %341 = vmatmul.mubr.f32.gmra.mxu0 %v131
    %v342 = vpop.f32.mrf.mxu0
    %v343 = vadd.f32 0.0, %v342
    %v344 = vpop.f32.mrf.mxu0
    %345 = vmatprep.mubr.f32.mxu0 0.0
    %346 = vmatmul.mubr.f32.gmra.mxu0 %v134
    %v347 = vpop.f32.mrf.mxu0
    %v348 = vadd.f32 0.0, %v347
    %v349 = vpop.f32.mrf.mxu0
    %350 = vmatprep.mubr.f32.mxu0 0.0
    %351 = vmatmul.mubr.f32.gmra.mxu0 %v137
    %v352 = vpop.f32.mrf.mxu0
    %v353 = vadd.f32 0.0, %v352
    %v354 = vpop.f32.mrf.mxu0
    %355 = vmatprep.mubr.f32.mxu0 0.0
    %356 = vmatmul.mubr.f32.gmra.mxu0 %v140
    %v357 = vpop.f32.mrf.mxu0
    %v358 = vadd.f32 0.0, %v357
    %v359 = vpop.f32.mrf.mxu0
    %360 = vmatprep.mubr.f32.mxu0 0.0
    %361 = vmatmul.mubr.f32.gmra.mxu0 %v143
    %v362 = vpop.f32.mrf.mxu0
    %v363 = vadd.f32 0.0, %v362
    %v364 = vpop.f32.mrf.mxu0
    %365 = vmatprep.mubr.f32.mxu0 0.0
    %366 = vmatmul.mubr.f32.gmra.mxu0 %v146
    %v367 = vpop.f32.mrf.mxu0
    %v368 = vadd.f32 0.0, %v367
    %v369 = vpop.f32.mrf.mxu0
    %370 = vmatprep.mubr.f32.mxu0 0.0
    %371 = vmatmul.mubr.f32.gmra.mxu0 %v149
    %v372 = vpop.f32.mrf.mxu0
    %v373 = vadd.f32 0.0, %v372
    %v374 = vpop.f32.mrf.mxu0
    %375 = vdwg.mxu0
    %376 = vst [vmem:[#allocation2] sm:$0xff] %v218
    %377 = vst [vmem:[#allocation2 + $0x8] sm:$0xff] %v223
    %378 = vst [vmem:[#allocation2 + $0x10] sm:$0xff] %v228
    %379 = vst [vmem:[#allocation2 + $0x18] sm:$0xff] %v233
    %380 = vst [vmem:[#allocation2 + $0x20] sm:$0xff] %v238
    %381 = vst [vmem:[#allocation2 + $0x28] sm:$0xff] %v243
    %382 = vst [vmem:[#allocation2 + $0x30] sm:$0xff] %v248
    %383 = vst [vmem:[#allocation2 + $0x38] sm:$0xff] %v253
    %384 = vst [vmem:[#allocation2 + $0x40] sm:$0xff] %v258
    %385 = vst [vmem:[#allocation2 + $0x48] sm:$0xff] %v263
    %386 = vst [vmem:[#allocation2 + $0x50] sm:$0xff] %v268
    %387 = vst [vmem:[#allocation2 + $0x58] sm:$0xff] %v273
    %388 = vst [vmem:[#allocation2 + $0x60] sm:$0xff] %v278
    %389 = vst [vmem:[#allocation2 + $0x68] sm:$0xff] %v283
    %390 = vst [vmem:[#allocation2 + $0x70] sm:$0xff] %v288
    %391 = vst [vmem:[#allocation2 + $0x78] sm:$0xff] %v293
    %392 = vst [vmem:[#allocation2 + $0x80] sm:$0xff] %v298
    %393 = vst [vmem:[#allocation2 + $0x88] sm:$0xff] %v303
    %394 = vst [vmem:[#allocation2 + $0x90] sm:$0xff] %v308
    %395 = vst [vmem:[#allocation2 + $0x98] sm:$0xff] %v313
    %396 = vst [vmem:[#allocation2 + $0xa0] sm:$0xff] %v318
    %397 = vst [vmem:[#allocation2 + $0xa8] sm:$0xff] %v323
    %398 = vst [vmem:[#allocation2 + $0xb0] sm:$0xff] %v328
    %399 = vst [vmem:[#allocation2 + $0xb8] sm:$0xff] %v333
    %400 = vst [vmem:[#allocation2 + $0xc0] sm:$0xff] %v338
    %401 = vst [vmem:[#allocation2 + $0xc8] sm:$0xff] %v343
    %402 = vst [vmem:[#allocation2 + $0xd0] sm:$0xff] %v348
    %403 = vst [vmem:[#allocation2 + $0xd8] sm:$0xff] %v353
    %404 = vst [vmem:[#allocation2 + $0xe0] sm:$0xff] %v358
    %405 = vst [vmem:[#allocation2 + $0xe8] sm:$0xff] %v363
    %406 = vst [vmem:[#allocation2 + $0xf0] sm:$0xff] %v368
    %407 = vst [vmem:[#allocation2 + $0xf8] sm:$0xff] %v373
    %v408 = vmul.f32 %v218, %v218
    %v409 = vmul.f32 %v223, %v223
    %v410 = vmul.f32 %v228, %v228
    %v411 = vmul.f32 %v233, %v233
    %v412 = vmul.f32 %v238, %v238
    %v413 = vmul.f32 %v243, %v243
    %v414 = vmul.f32 %v248, %v248
    %v415 = vmul.f32 %v253, %v253
    %v416 = vmul.f32 %v258, %v258
    %v417 = vmul.f32 %v263, %v263
    %v418 = vmul.f32 %v268, %v268
    %v419 = vmul.f32 %v273, %v273
    %v420 = vmul.f32 %v278, %v278
    %v421 = vmul.f32 %v283, %v283
    %v422 = vmul.f32 %v288, %v288
    %v423 = vmul.f32 %v293, %v293
    %v424 = vmul.f32 %v298, %v298
    %v425 = vmul.f32 %v303, %v303
    %v426 = vmul.f32 %v308, %v308
    %v427 = vmul.f32 %v313, %v313
    %v428 = vmul.f32 %v318, %v318
    %v429 = vmul.f32 %v323, %v323
    %v430 = vmul.f32 %v328, %v328
    %v431 = vmul.f32 %v333, %v333
    %v432 = vmul.f32 %v338, %v338
    %v433 = vmul.f32 %v343, %v343
    %v434 = vmul.f32 %v348, %v348
    %v435 = vmul.f32 %v353, %v353
    %v436 = vmul.f32 %v358, %v358
    %v437 = vmul.f32 %v363, %v363
    %v438 = vmul.f32 %v368, %v368
    %v439 = vmul.f32 %v373, %v373
    %vm440 = vcmask 261120
    %v441 = vsel %vm440, %v408, 0.0
    %442 = vadd.xlane.f32.xlu0 %v441
    %v443 = vpop.xlane.xlu0 %442
    %v444 = vsel %vm440, %v409, 0.0
    %445 = vadd.xlane.f32.xlu0 %v444
    %v446 = vpop.xlane.xlu0 %445
    %v447 = vsel %vm440, %v410, 0.0
    %448 = vadd.xlane.f32.xlu0 %v447
    %v449 = vpop.xlane.xlu0 %448
    %v450 = vsel %vm440, %v411, 0.0
    %451 = vadd.xlane.f32.xlu0 %v450
    %v452 = vpop.xlane.xlu0 %451
    %v453 = vsel %vm440, %v412, 0.0
    %454 = vadd.xlane.f32.xlu0 %v453
    %v455 = vpop.xlane.xlu0 %454
    %v456 = vsel %vm440, %v413, 0.0
    %457 = vadd.xlane.f32.xlu0 %v456
    %v458 = vpop.xlane.xlu0 %457
    %v459 = vsel %vm440, %v414, 0.0
    %460 = vadd.xlane.f32.xlu0 %v459
    %v461 = vpop.xlane.xlu0 %460
    %v462 = vsel %vm440, %v415, 0.0
    %463 = vadd.xlane.f32.xlu0 %v462
    %v464 = vpop.xlane.xlu0 %463
    %v465 = vsel %vm440, %v416, 0.0
    %466 = vadd.xlane.f32.xlu0 %v465
    %v467 = vpop.xlane.xlu0 %466
    %v468 = vsel %vm440, %v417, 0.0
    %469 = vadd.xlane.f32.xlu0 %v468
    %v470 = vpop.xlane.xlu0 %469
    %v471 = vsel %vm440, %v418, 0.0
    %472 = vadd.xlane.f32.xlu0 %v471
    %v473 = vpop.xlane.xlu0 %472
    %v474 = vsel %vm440, %v419, 0.0
    %475 = vadd.xlane.f32.xlu0 %v474
    %v476 = vpop.xlane.xlu0 %475
    %v477 = vsel %vm440, %v420, 0.0
    %478 = vadd.xlane.f32.xlu0 %v477
    %v479 = vpop.xlane.xlu0 %478
    %v480 = vsel %vm440, %v421, 0.0
    %481 = vadd.xlane.f32.xlu0 %v480
    %v482 = vpop.xlane.xlu0 %481
    %v483 = vsel %vm440, %v422, 0.0
    %484 = vadd.xlane.f32.xlu0 %v483
    %v485 = vpop.xlane.xlu0 %484
    %v486 = vsel %vm440, %v423, 0.0
    %487 = vadd.xlane.f32.xlu0 %v486
    %v488 = vpop.xlane.xlu0 %487
    %v489 = vsel %vm440, %v424, 0.0
    %490 = vadd.xlane.f32.xlu0 %v489
    %v491 = vpop.xlane.xlu0 %490
    %v492 = vsel %vm440, %v425, 0.0
    %493 = vadd.xlane.f32.xlu0 %v492
    %v494 = vpop.xlane.xlu0 %493
    %v495 = vsel %vm440, %v426, 0.0
    %496 = vadd.xlane.f32.xlu0 %v495
    %v497 = vpop.xlane.xlu0 %496
    %v498 = vsel %vm440, %v427, 0.0
    %499 = vadd.xlane.f32.xlu0 %v498
    %v500 = vpop.xlane.xlu0 %499
    %v501 = vsel %vm440, %v428, 0.0
    %502 = vadd.xlane.f32.xlu0 %v501
    %v503 = vpop.xlane.xlu0 %502
    %v504 = vsel %vm440, %v429, 0.0
    %505 = vadd.xlane.f32.xlu0 %v504
    %v506 = vpop.xlane.xlu0 %505
    %v507 = vsel %vm440, %v430, 0.0
    %508 = vadd.xlane.f32.xlu0 %v507
    %v509 = vpop.xlane.xlu0 %508
    %v510 = vsel %vm440, %v431, 0.0
    %511 = vadd.xlane.f32.xlu0 %v510
    %v512 = vpop.xlane.xlu0 %511
    %v513 = vsel %vm440, %v432, 0.0
    %514 = vadd.xlane.f32.xlu0 %v513
    %v515 = vpop.xlane.xlu0 %514
    %v516 = vsel %vm440, %v433, 0.0
    %517 = vadd.xlane.f32.xlu0 %v516
    %v518 = vpop.xlane.xlu0 %517
    %v519 = vsel %vm440, %v434, 0.0
    %520 = vadd.xlane.f32.xlu0 %v519
    %v521 = vpop.xlane.xlu0 %520
    %v522 = vsel %vm440, %v435, 0.0
    %523 = vadd.xlane.f32.xlu0 %v522
    %v524 = vpop.xlane.xlu0 %523
    %v525 = vsel %vm440, %v436, 0.0
    %526 = vadd.xlane.f32.xlu0 %v525
    %v527 = vpop.xlane.xlu0 %526
    %v528 = vsel %vm440, %v437, 0.0
    %529 = vadd.xlane.f32.xlu0 %v528
    %v530 = vpop.xlane.xlu0 %529
    %v531 = vsel %vm440, %v438, 0.0
    %532 = vadd.xlane.f32.xlu0 %v531
    %v533 = vpop.xlane.xlu0 %532
    %v534 = vsel %vm440, %v439, 0.0
    %535 = vadd.xlane.f32.xlu0 %v534
    %v536 = vpop.xlane.xlu0 %535
    %569 = vrot.lane.b32.xlu0 %v408, 96
    %v570 = vpop.permute.xlu0 %569
    %571 = vrot.lane.b32.xlu0 %v409, 96
    %v572 = vpop.permute.xlu0 %571
    %573 = vrot.lane.b32.xlu0 %v410, 96
    %v574 = vpop.permute.xlu0 %573
    %575 = vrot.lane.b32.xlu0 %v411, 96
    %v576 = vpop.permute.xlu0 %575
    %577 = vrot.lane.b32.xlu0 %v412, 96
    %v578 = vpop.permute.xlu0 %577
    %579 = vrot.lane.b32.xlu0 %v413, 96
    %v580 = vpop.permute.xlu0 %579
    %581 = vrot.lane.b32.xlu0 %v414, 96
    %v582 = vpop.permute.xlu0 %581
    %583 = vrot.lane.b32.xlu0 %v415, 96
    %v584 = vpop.permute.xlu0 %583
    %585 = vrot.lane.b32.xlu0 %v416, 96
    %v586 = vpop.permute.xlu0 %585
    %587 = vrot.lane.b32.xlu0 %v417, 96
    %v588 = vpop.permute.xlu0 %587
    %589 = vrot.lane.b32.xlu0 %v418, 96
    %v590 = vpop.permute.xlu0 %589
    %591 = vrot.lane.b32.xlu0 %v419, 96
    %v592 = vpop.permute.xlu0 %591
    %593 = vrot.lane.b32.xlu0 %v420, 96
    %v594 = vpop.permute.xlu0 %593
    %595 = vrot.lane.b32.xlu0 %v421, 96
    %v596 = vpop.permute.xlu0 %595
    %597 = vrot.lane.b32.xlu0 %v422, 96
    %v598 = vpop.permute.xlu0 %597
    %599 = vrot.lane.b32.xlu0 %v423, 96
    %v600 = vpop.permute.xlu0 %599
    %601 = vrot.lane.b32.xlu0 %v424, 96
    %v602 = vpop.permute.xlu0 %601
    %603 = vrot.lane.b32.xlu0 %v425, 96
    %v604 = vpop.permute.xlu0 %603
    %605 = vrot.lane.b32.xlu0 %v426, 96
    %v606 = vpop.permute.xlu0 %605
    %607 = vrot.lane.b32.xlu0 %v427, 96
    %v608 = vpop.permute.xlu0 %607
    %609 = vrot.lane.b32.xlu0 %v428, 96
    %v610 = vpop.permute.xlu0 %609
    %611 = vrot.lane.b32.xlu0 %v429, 96
    %v612 = vpop.permute.xlu0 %611
    %613 = vrot.lane.b32.xlu0 %v430, 96
    %v614 = vpop.permute.xlu0 %613
    %615 = vrot.lane.b32.xlu0 %v431, 96
    %v616 = vpop.permute.xlu0 %615
    %617 = vrot.lane.b32.xlu0 %v432, 96
    %v618 = vpop.permute.xlu0 %617
    %619 = vrot.lane.b32.xlu0 %v433, 96
    %v620 = vpop.permute.xlu0 %619
    %621 = vrot.lane.b32.xlu0 %v434, 96
    %v622 = vpop.permute.xlu0 %621
    %623 = vrot.lane.b32.xlu0 %v435, 96
    %v624 = vpop.permute.xlu0 %623
    %625 = vrot.lane.b32.xlu0 %v436, 96
    %v626 = vpop.permute.xlu0 %625
    %627 = vrot.lane.b32.xlu0 %v437, 96
    %v628 = vpop.permute.xlu0 %627
    %629 = vrot.lane.b32.xlu0 %v438, 96
    %v630 = vpop.permute.xlu0 %629
    %631 = vrot.lane.b32.xlu0 %v439, 96
    %v632 = vpop.permute.xlu0 %631
    %v665 = vsel %vm440, %v570, 0.0
    %666 = vadd.xlane.f32.xlu0 %v665
    %v667 = vpop.xlane.xlu0 %666
    %v668 = vsel %vm440, %v572, 0.0
    %669 = vadd.xlane.f32.xlu0 %v668
    %v670 = vpop.xlane.xlu0 %669
    %v671 = vsel %vm440, %v574, 0.0
    %672 = vadd.xlane.f32.xlu0 %v671
    %v673 = vpop.xlane.xlu0 %672
    %v674 = vsel %vm440, %v576, 0.0
    %675 = vadd.xlane.f32.xlu0 %v674
    %v676 = vpop.xlane.xlu0 %675
    %v677 = vsel %vm440, %v578, 0.0
    %678 = vadd.xlane.f32.xlu0 %v677
    %v679 = vpop.xlane.xlu0 %678
    %v680 = vsel %vm440, %v580, 0.0
    %681 = vadd.xlane.f32.xlu0 %v680
    %v682 = vpop.xlane.xlu0 %681
    %v683 = vsel %vm440, %v582, 0.0
    %684 = vadd.xlane.f32.xlu0 %v683
    %v685 = vpop.xlane.xlu0 %684
    %v686 = vsel %vm440, %v584, 0.0
    %687 = vadd.xlane.f32.xlu0 %v686
    %v688 = vpop.xlane.xlu0 %687
    %v689 = vsel %vm440, %v586, 0.0
    %690 = vadd.xlane.f32.xlu0 %v689
    %v691 = vpop.xlane.xlu0 %690
    %v692 = vsel %vm440, %v588, 0.0
    %693 = vadd.xlane.f32.xlu0 %v692
    %v694 = vpop.xlane.xlu0 %693
    %v695 = vsel %vm440, %v590, 0.0
    %696 = vadd.xlane.f32.xlu0 %v695
    %v697 = vpop.xlane.xlu0 %696
    %v698 = vsel %vm440, %v592, 0.0
    %699 = vadd.xlane.f32.xlu0 %v698
    %v700 = vpop.xlane.xlu0 %699
    %v701 = vsel %vm440, %v594, 0.0
    %702 = vadd.xlane.f32.xlu0 %v701
    %v703 = vpop.xlane.xlu0 %702
    %v704 = vsel %vm440, %v596, 0.0
    %705 = vadd.xlane.f32.xlu0 %v704
    %v706 = vpop.xlane.xlu0 %705
    %v707 = vsel %vm440, %v598, 0.0
    %708 = vadd.xlane.f32.xlu0 %v707
    %v709 = vpop.xlane.xlu0 %708
    %v710 = vsel %vm440, %v600, 0.0
    %711 = vadd.xlane.f32.xlu0 %v710
    %v712 = vpop.xlane.xlu0 %711
    %v713 = vsel %vm440, %v602, 0.0
    %714 = vadd.xlane.f32.xlu0 %v713
    %v715 = vpop.xlane.xlu0 %714
    %v716 = vsel %vm440, %v604, 0.0
    %717 = vadd.xlane.f32.xlu0 %v716
    %v718 = vpop.xlane.xlu0 %717
    %v719 = vsel %vm440, %v606, 0.0
    %720 = vadd.xlane.f32.xlu0 %v719
    %v721 = vpop.xlane.xlu0 %720
    %v722 = vsel %vm440, %v608, 0.0
    %723 = vadd.xlane.f32.xlu0 %v722
    %v724 = vpop.xlane.xlu0 %723
    %v725 = vsel %vm440, %v610, 0.0
    %726 = vadd.xlane.f32.xlu0 %v725
    %v727 = vpop.xlane.xlu0 %726
    %v728 = vsel %vm440, %v612, 0.0
    %729 = vadd.xlane.f32.xlu0 %v728
    %v730 = vpop.xlane.xlu0 %729
    %v731 = vsel %vm440, %v614, 0.0
    %732 = vadd.xlane.f32.xlu0 %v731
    %v733 = vpop.xlane.xlu0 %732
    %v734 = vsel %vm440, %v616, 0.0
    %735 = vadd.xlane.f32.xlu0 %v734
    %v736 = vpop.xlane.xlu0 %735
    %v737 = vsel %vm440, %v618, 0.0
    %738 = vadd.xlane.f32.xlu0 %v737
    %v739 = vpop.xlane.xlu0 %738
    %v740 = vsel %vm440, %v620, 0.0
    %741 = vadd.xlane.f32.xlu0 %v740
    %v742 = vpop.xlane.xlu0 %741
    %v743 = vsel %vm440, %v622, 0.0
    %744 = vadd.xlane.f32.xlu0 %v743
    %v745 = vpop.xlane.xlu0 %744
    %v746 = vsel %vm440, %v624, 0.0
    %747 = vadd.xlane.f32.xlu0 %v746
    %v748 = vpop.xlane.xlu0 %747
    %v749 = vsel %vm440, %v626, 0.0
    %750 = vadd.xlane.f32.xlu0 %v749
    %v751 = vpop.xlane.xlu0 %750
    %v752 = vsel %vm440, %v628, 0.0
    %753 = vadd.xlane.f32.xlu0 %v752
    %v754 = vpop.xlane.xlu0 %753
    %v755 = vsel %vm440, %v630, 0.0
    %756 = vadd.xlane.f32.xlu0 %v755
    %v757 = vpop.xlane.xlu0 %756
    %v758 = vsel %vm440, %v632, 0.0
    %759 = vadd.xlane.f32.xlu0 %v758
    %v760 = vpop.xlane.xlu0 %759
    %761 = vrot.lane.b32.xlu0 %v408, 64
    %v762 = vpop.permute.xlu0 %761
    %763 = vrot.lane.b32.xlu0 %v409, 64
    %v764 = vpop.permute.xlu0 %763
    %765 = vrot.lane.b32.xlu0 %v410, 64
    %v766 = vpop.permute.xlu0 %765
    %767 = vrot.lane.b32.xlu0 %v411, 64
    %v768 = vpop.permute.xlu0 %767
    %769 = vrot.lane.b32.xlu0 %v412, 64
    %v770 = vpop.permute.xlu0 %769
    %771 = vrot.lane.b32.xlu0 %v413, 64
    %v772 = vpop.permute.xlu0 %771
    %773 = vrot.lane.b32.xlu0 %v414, 64
    %v774 = vpop.permute.xlu0 %773
    %775 = vrot.lane.b32.xlu0 %v415, 64
    %v776 = vpop.permute.xlu0 %775
    %777 = vrot.lane.b32.xlu0 %v416, 64
    %v778 = vpop.permute.xlu0 %777
    %779 = vrot.lane.b32.xlu0 %v417, 64
    %v780 = vpop.permute.xlu0 %779
    %781 = vrot.lane.b32.xlu0 %v418, 64
    %v782 = vpop.permute.xlu0 %781
    %783 = vrot.lane.b32.xlu0 %v419, 64
    %v784 = vpop.permute.xlu0 %783
    %785 = vrot.lane.b32.xlu0 %v420, 64
    %v786 = vpop.permute.xlu0 %785
    %787 = vrot.lane.b32.xlu0 %v421, 64
    %v788 = vpop.permute.xlu0 %787
    %789 = vrot.lane.b32.xlu0 %v422, 64
    %v790 = vpop.permute.xlu0 %789
    %791 = vrot.lane.b32.xlu0 %v423, 64
    %v792 = vpop.permute.xlu0 %791
    %793 = vrot.lane.b32.xlu0 %v424, 64
    %v794 = vpop.permute.xlu0 %793
    %795 = vrot.lane.b32.xlu0 %v425, 64
    %v796 = vpop.permute.xlu0 %795
    %797 = vrot.lane.b32.xlu0 %v426, 64
    %v798 = vpop.permute.xlu0 %797
    %799 = vrot.lane.b32.xlu0 %v427, 64
    %v800 = vpop.permute.xlu0 %799
    %801 = vrot.lane.b32.xlu0 %v428, 64
    %v802 = vpop.permute.xlu0 %801
    %803 = vrot.lane.b32.xlu0 %v429, 64
    %v804 = vpop.permute.xlu0 %803
    %805 = vrot.lane.b32.xlu0 %v430, 64
    %v806 = vpop.permute.xlu0 %805
    %807 = vrot.lane.b32.xlu0 %v431, 64
    %v808 = vpop.permute.xlu0 %807
    %809 = vrot.lane.b32.xlu0 %v432, 64
    %v810 = vpop.permute.xlu0 %809
    %811 = vrot.lane.b32.xlu0 %v433, 64
    %v812 = vpop.permute.xlu0 %811
    %813 = vrot.lane.b32.xlu0 %v434, 64
    %v814 = vpop.permute.xlu0 %813
    %815 = vrot.lane.b32.xlu0 %v435, 64
    %v816 = vpop.permute.xlu0 %815
    %817 = vrot.lane.b32.xlu0 %v436, 64
    %v818 = vpop.permute.xlu0 %817
    %819 = vrot.lane.b32.xlu0 %v437, 64
    %v820 = vpop.permute.xlu0 %819
    %821 = vrot.lane.b32.xlu0 %v438, 64
    %v822 = vpop.permute.xlu0 %821
    %823 = vrot.lane.b32.xlu0 %v439, 64
    %v824 = vpop.permute.xlu0 %823
    %v857 = vsel %vm440, %v762, 0.0
    %858 = vadd.xlane.f32.xlu0 %v857
    %v859 = vpop.xlane.xlu0 %858
    %v860 = vsel %vm440, %v764, 0.0
    %861 = vadd.xlane.f32.xlu0 %v860
    %v862 = vpop.xlane.xlu0 %861
    %v863 = vsel %vm440, %v766, 0.0
    %864 = vadd.xlane.f32.xlu0 %v863
    %v865 = vpop.xlane.xlu0 %864
    %v866 = vsel %vm440, %v768, 0.0
    %867 = vadd.xlane.f32.xlu0 %v866
    %v868 = vpop.xlane.xlu0 %867
    %v869 = vsel %vm440, %v770, 0.0
    %870 = vadd.xlane.f32.xlu0 %v869
    %v871 = vpop.xlane.xlu0 %870
    %v872 = vsel %vm440, %v772, 0.0
    %873 = vadd.xlane.f32.xlu0 %v872
    %v874 = vpop.xlane.xlu0 %873
    %v875 = vsel %vm440, %v774, 0.0
    %876 = vadd.xlane.f32.xlu0 %v875
    %v877 = vpop.xlane.xlu0 %876
    %v878 = vsel %vm440, %v776, 0.0
    %879 = vadd.xlane.f32.xlu0 %v878
    %v880 = vpop.xlane.xlu0 %879
    %v881 = vsel %vm440, %v778, 0.0
    %882 = vadd.xlane.f32.xlu0 %v881
    %v883 = vpop.xlane.xlu0 %882
    %v884 = vsel %vm440, %v780, 0.0
    %885 = vadd.xlane.f32.xlu0 %v884
    %v886 = vpop.xlane.xlu0 %885
    %v887 = vsel %vm440, %v782, 0.0
    %888 = vadd.xlane.f32.xlu0 %v887
    %v889 = vpop.xlane.xlu0 %888
    %v890 = vsel %vm440, %v784, 0.0
    %891 = vadd.xlane.f32.xlu0 %v890
    %v892 = vpop.xlane.xlu0 %891
    %v893 = vsel %vm440, %v786, 0.0
    %894 = vadd.xlane.f32.xlu0 %v893
    %v895 = vpop.xlane.xlu0 %894
    %v896 = vsel %vm440, %v788, 0.0
    %897 = vadd.xlane.f32.xlu0 %v896
    %v898 = vpop.xlane.xlu0 %897
    %v899 = vsel %vm440, %v790, 0.0
    %900 = vadd.xlane.f32.xlu0 %v899
    %v901 = vpop.xlane.xlu0 %900
    %v902 = vsel %vm440, %v792, 0.0
    %903 = vadd.xlane.f32.xlu0 %v902
    %v904 = vpop.xlane.xlu0 %903
    %v905 = vsel %vm440, %v794, 0.0
    %906 = vadd.xlane.f32.xlu0 %v905
    %v907 = vpop.xlane.xlu0 %906
    %v908 = vsel %vm440, %v796, 0.0
    %909 = vadd.xlane.f32.xlu0 %v908
    %v910 = vpop.xlane.xlu0 %909
    %v911 = vsel %vm440, %v798, 0.0
    %912 = vadd.xlane.f32.xlu0 %v911
    %v913 = vpop.xlane.xlu0 %912
    %v914 = vsel %vm440, %v800, 0.0
    %915 = vadd.xlane.f32.xlu0 %v914
    %v916 = vpop.xlane.xlu0 %915
    %v917 = vsel %vm440, %v802, 0.0
    %918 = vadd.xlane.f32.xlu0 %v917
    %v919 = vpop.xlane.xlu0 %918
    %v920 = vsel %vm440, %v804, 0.0
    %921 = vadd.xlane.f32.xlu0 %v920
    %v922 = vpop.xlane.xlu0 %921
    %v923 = vsel %vm440, %v806, 0.0
    %924 = vadd.xlane.f32.xlu0 %v923
    %v925 = vpop.xlane.xlu0 %924
    %v926 = vsel %vm440, %v808, 0.0
    %927 = vadd.xlane.f32.xlu0 %v926
    %v928 = vpop.xlane.xlu0 %927
    %v929 = vsel %vm440, %v810, 0.0
    %930 = vadd.xlane.f32.xlu0 %v929
    %v931 = vpop.xlane.xlu0 %930
    %v932 = vsel %vm440, %v812, 0.0
    %933 = vadd.xlane.f32.xlu0 %v932
    %v934 = vpop.xlane.xlu0 %933
    %v935 = vsel %vm440, %v814, 0.0
    %936 = vadd.xlane.f32.xlu0 %v935
    %v937 = vpop.xlane.xlu0 %936
    %v938 = vsel %vm440, %v816, 0.0
    %939 = vadd.xlane.f32.xlu0 %v938
    %v940 = vpop.xlane.xlu0 %939
    %v941 = vsel %vm440, %v818, 0.0
    %942 = vadd.xlane.f32.xlu0 %v941
    %v943 = vpop.xlane.xlu0 %942
    %v944 = vsel %vm440, %v820, 0.0
    %945 = vadd.xlane.f32.xlu0 %v944
    %v946 = vpop.xlane.xlu0 %945
    %v947 = vsel %vm440, %v822, 0.0
    %948 = vadd.xlane.f32.xlu0 %v947
    %v949 = vpop.xlane.xlu0 %948
    %v950 = vsel %vm440, %v824, 0.0
    %951 = vadd.xlane.f32.xlu0 %v950
    %v952 = vpop.xlane.xlu0 %951
    %953 = vrot.lane.b32.xlu0 %v408, 32
    %v954 = vpop.permute.xlu0 %953
    %955 = vrot.lane.b32.xlu0 %v409, 32
    %v956 = vpop.permute.xlu0 %955
    %957 = vrot.lane.b32.xlu0 %v410, 32
    %v958 = vpop.permute.xlu0 %957
    %959 = vrot.lane.b32.xlu0 %v411, 32
    %v960 = vpop.permute.xlu0 %959
    %961 = vrot.lane.b32.xlu0 %v412, 32
    %v962 = vpop.permute.xlu0 %961
    %963 = vrot.lane.b32.xlu0 %v413, 32
    %v964 = vpop.permute.xlu0 %963
    %965 = vrot.lane.b32.xlu0 %v414, 32
    %v966 = vpop.permute.xlu0 %965
    %967 = vrot.lane.b32.xlu0 %v415, 32
    %v968 = vpop.permute.xlu0 %967
    %969 = vrot.lane.b32.xlu0 %v416, 32
    %v970 = vpop.permute.xlu0 %969
    %971 = vrot.lane.b32.xlu0 %v417, 32
    %v972 = vpop.permute.xlu0 %971
    %973 = vrot.lane.b32.xlu0 %v418, 32
    %v974 = vpop.permute.xlu0 %973
    %975 = vrot.lane.b32.xlu0 %v419, 32
    %v976 = vpop.permute.xlu0 %975
    %977 = vrot.lane.b32.xlu0 %v420, 32
    %v978 = vpop.permute.xlu0 %977
    %979 = vrot.lane.b32.xlu0 %v421, 32
    %v980 = vpop.permute.xlu0 %979
    %981 = vrot.lane.b32.xlu0 %v422, 32
    %v982 = vpop.permute.xlu0 %981
    %983 = vrot.lane.b32.xlu0 %v423, 32
    %v984 = vpop.permute.xlu0 %983
    %985 = vrot.lane.b32.xlu0 %v424, 32
    %v986 = vpop.permute.xlu0 %985
    %987 = vrot.lane.b32.xlu0 %v425, 32
    %v988 = vpop.permute.xlu0 %987
    %989 = vrot.lane.b32.xlu0 %v426, 32
    %v990 = vpop.permute.xlu0 %989
    %991 = vrot.lane.b32.xlu0 %v427, 32
    %v992 = vpop.permute.xlu0 %991
    %993 = vrot.lane.b32.xlu0 %v428, 32
    %v994 = vpop.permute.xlu0 %993
    %995 = vrot.lane.b32.xlu0 %v429, 32
    %v996 = vpop.permute.xlu0 %995
    %997 = vrot.lane.b32.xlu0 %v430, 32
    %v998 = vpop.permute.xlu0 %997
    %999 = vrot.lane.b32.xlu0 %v431, 32
    %v1000 = vpop.permute.xlu0 %999
    %1001 = vrot.lane.b32.xlu0 %v432, 32
    %v1002 = vpop.permute.xlu0 %1001
    %1003 = vrot.lane.b32.xlu0 %v433, 32
    %v1004 = vpop.permute.xlu0 %1003
    %1005 = vrot.lane.b32.xlu0 %v434, 32
    %v1006 = vpop.permute.xlu0 %1005
    %1007 = vrot.lane.b32.xlu0 %v435, 32
    %v1008 = vpop.permute.xlu0 %1007
    %1009 = vrot.lane.b32.xlu0 %v436, 32
    %v1010 = vpop.permute.xlu0 %1009
    %1011 = vrot.lane.b32.xlu0 %v437, 32
    %v1012 = vpop.permute.xlu0 %1011
    %1013 = vrot.lane.b32.xlu0 %v438, 32
    %v1014 = vpop.permute.xlu0 %1013
    %1015 = vrot.lane.b32.xlu0 %v439, 32
    %v1016 = vpop.permute.xlu0 %1015
    %v1049 = vsel %vm440, %v954, 0.0
    %1050 = vadd.xlane.f32.xlu0 %v1049
    %v1051 = vpop.xlane.xlu0 %1050
    %v1052 = vsel %vm440, %v956, 0.0
    %1053 = vadd.xlane.f32.xlu0 %v1052
    %v1054 = vpop.xlane.xlu0 %1053
    %v1055 = vsel %vm440, %v958, 0.0
    %1056 = vadd.xlane.f32.xlu0 %v1055
    %v1057 = vpop.xlane.xlu0 %1056
    %v1058 = vsel %vm440, %v960, 0.0
    %1059 = vadd.xlane.f32.xlu0 %v1058
    %v1060 = vpop.xlane.xlu0 %1059
    %v1061 = vsel %vm440, %v962, 0.0
    %1062 = vadd.xlane.f32.xlu0 %v1061
    %v1063 = vpop.xlane.xlu0 %1062
    %v1064 = vsel %vm440, %v964, 0.0
    %1065 = vadd.xlane.f32.xlu0 %v1064
    %v1066 = vpop.xlane.xlu0 %1065
    %v1067 = vsel %vm440, %v966, 0.0
    %1068 = vadd.xlane.f32.xlu0 %v1067
    %v1069 = vpop.xlane.xlu0 %1068
    %v1070 = vsel %vm440, %v968, 0.0
    %1071 = vadd.xlane.f32.xlu0 %v1070
    %v1072 = vpop.xlane.xlu0 %1071
    %v1073 = vsel %vm440, %v970, 0.0
    %1074 = vadd.xlane.f32.xlu0 %v1073
    %v1075 = vpop.xlane.xlu0 %1074
    %v1076 = vsel %vm440, %v972, 0.0
    %1077 = vadd.xlane.f32.xlu0 %v1076
    %v1078 = vpop.xlane.xlu0 %1077
    %v1079 = vsel %vm440, %v974, 0.0
    %1080 = vadd.xlane.f32.xlu0 %v1079
    %v1081 = vpop.xlane.xlu0 %1080
    %v1082 = vsel %vm440, %v976, 0.0
    %1083 = vadd.xlane.f32.xlu0 %v1082
    %v1084 = vpop.xlane.xlu0 %1083
    %v1085 = vsel %vm440, %v978, 0.0
    %1086 = vadd.xlane.f32.xlu0 %v1085
    %v1087 = vpop.xlane.xlu0 %1086
    %v1088 = vsel %vm440, %v980, 0.0
    %1089 = vadd.xlane.f32.xlu0 %v1088
    %v1090 = vpop.xlane.xlu0 %1089
    %v1091 = vsel %vm440, %v982, 0.0
    %1092 = vadd.xlane.f32.xlu0 %v1091
    %v1093 = vpop.xlane.xlu0 %1092
    %v1094 = vsel %vm440, %v984, 0.0
    %1095 = vadd.xlane.f32.xlu0 %v1094
    %v1096 = vpop.xlane.xlu0 %1095
    %v1097 = vsel %vm440, %v986, 0.0
    %1098 = vadd.xlane.f32.xlu0 %v1097
    %v1099 = vpop.xlane.xlu0 %1098
    %v1100 = vsel %vm440, %v988, 0.0
    %1101 = vadd.xlane.f32.xlu0 %v1100
    %v1102 = vpop.xlane.xlu0 %1101
    %v1103 = vsel %vm440, %v990, 0.0
    %1104 = vadd.xlane.f32.xlu0 %v1103
    %v1105 = vpop.xlane.xlu0 %1104
    %v1106 = vsel %vm440, %v992, 0.0
    %1107 = vadd.xlane.f32.xlu0 %v1106
    %v1108 = vpop.xlane.xlu0 %1107
    %v1109 = vsel %vm440, %v994, 0.0
    %1110 = vadd.xlane.f32.xlu0 %v1109
    %v1111 = vpop.xlane.xlu0 %1110
    %v1112 = vsel %vm440, %v996, 0.0
    %1113 = vadd.xlane.f32.xlu0 %v1112
    %v1114 = vpop.xlane.xlu0 %1113
    %v1115 = vsel %vm440, %v998, 0.0
    %1116 = vadd.xlane.f32.xlu0 %v1115
    %v1117 = vpop.xlane.xlu0 %1116
    %v1118 = vsel %vm440, %v1000, 0.0
    %1119 = vadd.xlane.f32.xlu0 %v1118
    %v1120 = vpop.xlane.xlu0 %1119
    %v1121 = vsel %vm440, %v1002, 0.0
    %1122 = vadd.xlane.f32.xlu0 %v1121
    %v1123 = vpop.xlane.xlu0 %1122
    %v1124 = vsel %vm440, %v1004, 0.0
    %1125 = vadd.xlane.f32.xlu0 %v1124
    %v1126 = vpop.xlane.xlu0 %1125
    %v1127 = vsel %vm440, %v1006, 0.0
    %1128 = vadd.xlane.f32.xlu0 %v1127
    %v1129 = vpop.xlane.xlu0 %1128
    %v1130 = vsel %vm440, %v1008, 0.0
    %1131 = vadd.xlane.f32.xlu0 %v1130
    %v1132 = vpop.xlane.xlu0 %1131
    %v1133 = vsel %vm440, %v1010, 0.0
    %1134 = vadd.xlane.f32.xlu0 %v1133
    %v1135 = vpop.xlane.xlu0 %1134
    %v1136 = vsel %vm440, %v1012, 0.0
    %1137 = vadd.xlane.f32.xlu0 %v1136
    %v1138 = vpop.xlane.xlu0 %1137
    %v1139 = vsel %vm440, %v1014, 0.0
    %1140 = vadd.xlane.f32.xlu0 %v1139
    %v1141 = vpop.xlane.xlu0 %1140
    %v1142 = vsel %vm440, %v1016, 0.0
    %1143 = vadd.xlane.f32.xlu0 %v1142
    %v1144 = vpop.xlane.xlu0 %1143
    %vm1145 = vcmask 7168
    %v1146 = vsel %vm1145, %v443, %v667
    %v1147 = vsel %vm1145, %v446, %v670
    %v1148 = vsel %vm1145, %v449, %v673
    %v1149 = vsel %vm1145, %v452, %v676
    %v1150 = vsel %vm1145, %v455, %v679
    %v1151 = vsel %vm1145, %v458, %v682
    %v1152 = vsel %vm1145, %v461, %v685
    %v1153 = vsel %vm1145, %v464, %v688
    %v1154 = vsel %vm1145, %v467, %v691
    %v1155 = vsel %vm1145, %v470, %v694
    %v1156 = vsel %vm1145, %v473, %v697
    %v1157 = vsel %vm1145, %v476, %v700
    %v1158 = vsel %vm1145, %v479, %v703
    %v1159 = vsel %vm1145, %v482, %v706
    %v1160 = vsel %vm1145, %v485, %v709
    %v1161 = vsel %vm1145, %v488, %v712
    %v1162 = vsel %vm1145, %v491, %v715
    %v1163 = vsel %vm1145, %v494, %v718
    %v1164 = vsel %vm1145, %v497, %v721
    %v1165 = vsel %vm1145, %v500, %v724
    %v1166 = vsel %vm1145, %v503, %v727
    %v1167 = vsel %vm1145, %v506, %v730
    %v1168 = vsel %vm1145, %v509, %v733
    %v1169 = vsel %vm1145, %v512, %v736
    %v1170 = vsel %vm1145, %v515, %v739
    %v1171 = vsel %vm1145, %v518, %v742
    %v1172 = vsel %vm1145, %v521, %v745
    %v1173 = vsel %vm1145, %v524, %v748
    %v1174 = vsel %vm1145, %v527, %v751
    %v1175 = vsel %vm1145, %v530, %v754
    %v1176 = vsel %vm1145, %v533, %v757
    %v1177 = vsel %vm1145, %v536, %v760
    %vm1178 = vcmask 15360
    %v1179 = vsel %vm1178, %v1146, %v859
    %v1180 = vsel %vm1178, %v1147, %v862
    %v1181 = vsel %vm1178, %v1148, %v865
    %v1182 = vsel %vm1178, %v1149, %v868
    %v1183 = vsel %vm1178, %v1150, %v871
    %v1184 = vsel %vm1178, %v1151, %v874
    %v1185 = vsel %vm1178, %v1152, %v877
    %v1186 = vsel %vm1178, %v1153, %v880
    %v1187 = vsel %vm1178, %v1154, %v883
    %v1188 = vsel %vm1178, %v1155, %v886
    %v1189 = vsel %vm1178, %v1156, %v889
    %v1190 = vsel %vm1178, %v1157, %v892
    %v1191 = vsel %vm1178, %v1158, %v895
    %v1192 = vsel %vm1178, %v1159, %v898
    %v1193 = vsel %vm1178, %v1160, %v901
    %v1194 = vsel %vm1178, %v1161, %v904
    %v1195 = vsel %vm1178, %v1162, %v907
    %v1196 = vsel %vm1178, %v1163, %v910
    %v1197 = vsel %vm1178, %v1164, %v913
    %v1198 = vsel %vm1178, %v1165, %v916
    %v1199 = vsel %vm1178, %v1166, %v919
    %v1200 = vsel %vm1178, %v1167, %v922
    %v1201 = vsel %vm1178, %v1168, %v925
    %v1202 = vsel %vm1178, %v1169, %v928
    %v1203 = vsel %vm1178, %v1170, %v931
    %v1204 = vsel %vm1178, %v1171, %v934
    %v1205 = vsel %vm1178, %v1172, %v937
    %v1206 = vsel %vm1178, %v1173, %v940
    %v1207 = vsel %vm1178, %v1174, %v943
    %v1208 = vsel %vm1178, %v1175, %v946
    %v1209 = vsel %vm1178, %v1176, %v949
    %v1210 = vsel %vm1178, %v1177, %v952
    %vm1211 = vcmask 23552
    %v1212 = vsel %vm1211, %v1179, %v1051
    %v1213 = vsel %vm1211, %v1180, %v1054
    %v1214 = vsel %vm1211, %v1181, %v1057
    %v1215 = vsel %vm1211, %v1182, %v1060
    %v1216 = vsel %vm1211, %v1183, %v1063
    %v1217 = vsel %vm1211, %v1184, %v1066
    %v1218 = vsel %vm1211, %v1185, %v1069
    %v1219 = vsel %vm1211, %v1186, %v1072
    %v1220 = vsel %vm1211, %v1187, %v1075
    %v1221 = vsel %vm1211, %v1188, %v1078
    %v1222 = vsel %vm1211, %v1189, %v1081
    %v1223 = vsel %vm1211, %v1190, %v1084
    %v1224 = vsel %vm1211, %v1191, %v1087
    %v1225 = vsel %vm1211, %v1192, %v1090
    %v1226 = vsel %vm1211, %v1193, %v1093
    %v1227 = vsel %vm1211, %v1194, %v1096
    %v1228 = vsel %vm1211, %v1195, %v1099
    %v1229 = vsel %vm1211, %v1196, %v1102
    %v1230 = vsel %vm1211, %v1197, %v1105
    %v1231 = vsel %vm1211, %v1198, %v1108
    %v1232 = vsel %vm1211, %v1199, %v1111
    %v1233 = vsel %vm1211, %v1200, %v1114
    %v1234 = vsel %vm1211, %v1201, %v1117
    %v1235 = vsel %vm1211, %v1202, %v1120
    %v1236 = vsel %vm1211, %v1203, %v1123
    %v1237 = vsel %vm1211, %v1204, %v1126
    %v1238 = vsel %vm1211, %v1205, %v1129
    %v1239 = vsel %vm1211, %v1206, %v1132
    %v1240 = vsel %vm1211, %v1207, %v1135
    %v1241 = vsel %vm1211, %v1208, %v1138
    %v1242 = vsel %vm1211, %v1209, %v1141
    %v1243 = vsel %vm1211, %v1210, %v1144
    %vm1244 = vcmask 31744
    %v1245 = vsel %vm1244, %v1212, 0.0
    %v1246 = vsel %vm1244, %v1213, 0.0
    %v1247 = vsel %vm1244, %v1214, 0.0
    %v1248 = vsel %vm1244, %v1215, 0.0
    %v1249 = vsel %vm1244, %v1216, 0.0
    %v1250 = vsel %vm1244, %v1217, 0.0
    %v1251 = vsel %vm1244, %v1218, 0.0
    %v1252 = vsel %vm1244, %v1219, 0.0
    %v1253 = vsel %vm1244, %v1220, 0.0
    %v1254 = vsel %vm1244, %v1221, 0.0
    %v1255 = vsel %vm1244, %v1222, 0.0
    %v1256 = vsel %vm1244, %v1223, 0.0
    %v1257 = vsel %vm1244, %v1224, 0.0
    %v1258 = vsel %vm1244, %v1225, 0.0
    %v1259 = vsel %vm1244, %v1226, 0.0
    %v1260 = vsel %vm1244, %v1227, 0.0
    %v1261 = vsel %vm1244, %v1228, 0.0
    %v1262 = vsel %vm1244, %v1229, 0.0
    %v1263 = vsel %vm1244, %v1230, 0.0
    %v1264 = vsel %vm1244, %v1231, 0.0
    %v1265 = vsel %vm1244, %v1232, 0.0
    %v1266 = vsel %vm1244, %v1233, 0.0
    %v1267 = vsel %vm1244, %v1234, 0.0
    %v1268 = vsel %vm1244, %v1235, 0.0
    %v1269 = vsel %vm1244, %v1236, 0.0
    %v1270 = vsel %vm1244, %v1237, 0.0
    %v1271 = vsel %vm1244, %v1238, 0.0
    %v1272 = vsel %vm1244, %v1239, 0.0
    %v1273 = vsel %vm1244, %v1240, 0.0
    %v1274 = vsel %vm1244, %v1241, 0.0
    %v1275 = vsel %vm1244, %v1242, 0.0
    %v1276 = vsel %vm1244, %v1243, 0.0
    %vm1277 = vcmask 64512
    %1278 = vst.msk [vmem:[%s3] sm:$0xff] %vm1277, %v1245
    %1279 = vst.msk [vmem:[%s3 + $0x8] sm:$0xff] %vm1277, %v1246
    %1280 = vst.msk [vmem:[%s3 + $0x10] sm:$0xff] %vm1277, %v1247
    %1281 = vst.msk [vmem:[%s3 + $0x18] sm:$0xff] %vm1277, %v1248
    %1282 = vst.msk [vmem:[%s3 + $0x20] sm:$0xff] %vm1277, %v1249
    %1283 = vst.msk [vmem:[%s3 + $0x28] sm:$0xff] %vm1277, %v1250
    %1284 = vst.msk [vmem:[%s3 + $0x30] sm:$0xff] %vm1277, %v1251
    %1285 = vst.msk [vmem:[%s3 + $0x38] sm:$0xff] %vm1277, %v1252
    %1286 = vst.msk [vmem:[%s3 + $0x40] sm:$0xff] %vm1277, %v1253
    %1287 = vst.msk [vmem:[%s3 + $0x48] sm:$0xff] %vm1277, %v1254
    %1288 = vst.msk [vmem:[%s3 + $0x50] sm:$0xff] %vm1277, %v1255
    %1289 = vst.msk [vmem:[%s3 + $0x58] sm:$0xff] %vm1277, %v1256
    %1290 = vst.msk [vmem:[%s3 + $0x60] sm:$0xff] %vm1277, %v1257
    %1291 = vst.msk [vmem:[%s3 + $0x68] sm:$0xff] %vm1277, %v1258
    %1292 = vst.msk [vmem:[%s3 + $0x70] sm:$0xff] %vm1277, %v1259
    %1293 = vst.msk [vmem:[%s3 + $0x78] sm:$0xff] %vm1277, %v1260
    %1294 = vst.msk [vmem:[%s3 + $0x80] sm:$0xff] %vm1277, %v1261
    %1295 = vst.msk [vmem:[%s3 + $0x88] sm:$0xff] %vm1277, %v1262
    %1296 = vst.msk [vmem:[%s3 + $0x90] sm:$0xff] %vm1277, %v1263
    %1297 = vst.msk [vmem:[%s3 + $0x98] sm:$0xff] %vm1277, %v1264
    %1298 = vst.msk [vmem:[%s3 + $0xa0] sm:$0xff] %vm1277, %v1265
    %1299 = vst.msk [vmem:[%s3 + $0xa8] sm:$0xff] %vm1277, %v1266
    %1300 = vst.msk [vmem:[%s3 + $0xb0] sm:$0xff] %vm1277, %v1267
    %1301 = vst.msk [vmem:[%s3 + $0xb8] sm:$0xff] %vm1277, %v1268
    %1302 = vst.msk [vmem:[%s3 + $0xc0] sm:$0xff] %vm1277, %v1269
    %1303 = vst.msk [vmem:[%s3 + $0xc8] sm:$0xff] %vm1277, %v1270
    %1304 = vst.msk [vmem:[%s3 + $0xd0] sm:$0xff] %vm1277, %v1271
    %1305 = vst.msk [vmem:[%s3 + $0xd8] sm:$0xff] %vm1277, %v1272
    %1306 = vst.msk [vmem:[%s3 + $0xe0] sm:$0xff] %vm1277, %v1273
    %1307 = vst.msk [vmem:[%s3 + $0xe8] sm:$0xff] %vm1277, %v1274
    %1308 = vst.msk [vmem:[%s3 + $0xf0] sm:$0xff] %vm1277, %v1275
    %1309 = vst.msk [vmem:[%s3 + $0xf8] sm:$0xff] %vm1277, %v1276
    // Predicated region
    $region10: #{tpu_custom_call.1} parent=1 // pred_check
      _
    $region11: #{tpu_custom_call.1} parent=1 // pred_check_branch
      %1311 = sbr.rel (0) target = $region13
    $region12: #{tpu_custom_call.1} parent=1 // pred_region
      %s1313 = ssub.s32 4096, 4096
      %1314 = vsyncadd [#allocation3], %s1313
      %s1315 = sshll.u32 [#allocation2], 4
      %s1316 = int_to_ptr.vmem [resolvable:$true] %s1315
      %1321 = dma.vmem_to_hbm [thread:$0]  %s1316, 4096, %s2, [#allocation3], 128, 128, 8
    $region13: #{tpu_custom_call.1} parent=1 // pred_fallthru
      _
    // Predicated region
    $region14: #{tpu_custom_call.1} parent=1 // pred_check
      _
    $region15: #{tpu_custom_call.1} parent=1 // pred_check_branch
      %1323 = sbr.rel (0) target = $region17
    $region16: #{tpu_custom_call.1} parent=1 // pred_region
      _
    $region17: #{tpu_custom_call.1} parent=1 // pred_fallthru
      _
    // Predicated region
    $region18: #{tpu_custom_call.1} parent=1 // pred_check
      _
    $region19: #{tpu_custom_call.1} parent=1 // pred_check_branch
      %1325 = sbr.rel (0) target = $region21
    $region20: #{tpu_custom_call.1} parent=1 // pred_region
      %1326 = dma.done [#allocation3], 4096
    $region21: #{tpu_custom_call.1} parent=1 // pred_fallthru
      _
    // Predicated region
    $region22: #{tpu_custom_call.1} parent=1 // pred_check
      _
    $region23: #{tpu_custom_call.1} parent=1 // pred_check_branch
      %1328 = sbr.rel (0) target = $region25
    $region24: #{tpu_custom_call.1} parent=1 // pred_region
      _
    $region25: #{tpu_custom_call.1} parent=1 // pred_fallthru
      _
    %1329 = vsyncpa [#allocation3], 1

</llo_original>
